<compile_context>
chip_gen: v7x
topology: tpu7x:2x2x1
jax: 0.10.0
libtpu: 0.0.40
codegen_flags: <defaults>
</compile_context>

<pallas_src>
import jax
import jax.numpy as jnp
from jax.experimental import pallas as pl
from jax.experimental.pallas import tpu as pltpu


def _discriminator_kernel(x_ref, w1_ref, b1_ref, w2_ref, b2_ref,
                          w3_ref, b3_ref, o_ref):
    """One batch tile of the fused 3-layer MLP; everything stays in VMEM.

    x_ref : (TB, D)    f32   batch tile (cast to bf16 here, not in the wrapper)
    w1_ref: (D, 512)   bf16  resident (pre-transposed at init)
    b1_ref: (1, 512)   f32
    w2_ref: (512, 256) bf16  resident
    b2_ref: (1, 256)   f32
    w3_ref: (1, 256)   f32   (torch (1, 256) row, applied on the VPU)
    b3_ref: (1, 1)     f32
    o_ref : (TB, 1)    f32
    """
    x = x_ref[...].astype(jnp.bfloat16)

    # Layer 1: (TB, D) @ (D, 512) -> (TB, 512); f32 accumulation on the MXU.
    h1 = jnp.dot(x, w1_ref[...], preferred_element_type=jnp.float32)
    h1 = h1 + b1_ref[...]
    h1 = jnp.maximum(h1, 0.2 * h1)                    # LeakyReLU(0.2)

    # Layer 2: (TB, 512) @ (512, 256) -> (TB, 256)
    h2 = jnp.dot(h1.astype(jnp.bfloat16), w2_ref[...],
                 preferred_element_type=jnp.float32)
    h2 = h2 + b2_ref[...]
    h2 = jnp.maximum(h2, 0.2 * h2)

    # Layer 3 (256 -> 1): VPU multiply + lane reduce; no N=1 MXU pass.
    h3 = jnp.sum(h2 * w3_ref[...], axis=-1, keepdims=True) + b3_ref[...]

    # Exact sigmoid (exp on the EUP; the divide only touches a (TB, 1) vector).
    o_ref[...] = 1.0 / (1.0 + jnp.exp(-h3))


def _resident_spec(shape):
    """Weight/bias block: constant index map -> stays in VMEM across tiles.

    Single-buffer it (the block never changes, so double-buffering only wastes
    VMEM); fall back to the default buffering if this JAX rejects the kwarg.
    """
    index_map = lambda i: (0, 0)
    try:
        return pl.BlockSpec(shape, index_map, pipeline_mode=pl.Buffered(1))
    except (TypeError, ValueError):
        return pl.BlockSpec(shape, index_map)


def discriminator_forward(img, kparams):
    """img: (B, C, H, W) float32.  kparams: output of prepare_params()."""
    B = img.shape[0]
    x = img.reshape(B, -1)                        # torch .view(B, -1); no cast pass
    D = x.shape[1]

    # Batch tiling: aim for >= 2 tiles (megacore / DMA-compute overlap) with
    # TB <= 128 (batch-major, so the MXU N dim is already 512/256 regardless).
    if B < 8:
        tb, b_pad = B, B                          # single ragged tile, no padding
    else:
        b8 = pl.cdiv(B, 8) * 8
        tb = b8 if b8 <= 16 else min(128, pl.cdiv(b8 // 2, 8) * 8)
        b_pad = pl.cdiv(B, tb) * tb
        if b_pad != B:                            # pad only the small remainder
            x = jnp.pad(x, ((0, b_pad - B), (0, 0)))

    grid_n = b_pad // tb

    w1, b1 = kparams["w1"], kparams["b1"]
    w2, b2 = kparams["w2"], kparams["b2"]
    w3, b3 = kparams["w3"], kparams["b3"]

    flops = 2 * b_pad * (D * 512 + 512 * 256 + 256)
    bytes_accessed = (x.size * x.dtype.itemsize
                      + w1.size * 2 + w2.size * 2
                      + (b1.size + b2.size + w3.size + b3.size) * 4
                      + b_pad * 4)

    out = pl.pallas_call(
        _discriminator_kernel,
        out_shape=jax.ShapeDtypeStruct((b_pad, 1), jnp.float32),
        grid=(grid_n,),
        in_specs=[
            pl.BlockSpec((tb, D), lambda i: (i, 0)),   # x: one batch tile / step
            _resident_spec(w1.shape), _resident_spec(b1.shape),
            _resident_spec(w2.shape), _resident_spec(b2.shape),
            _resident_spec(w3.shape), _resident_spec(b3.shape),
        ],
        out_specs=pl.BlockSpec((tb, 1), lambda i: (i, 0)),
        compiler_params=pltpu.CompilerParams(
            dimension_semantics=("parallel",),         # megacore-shardable on v7x
            vmem_limit_bytes=32 << 20),
        cost_estimate=pl.CostEstimate(
            flops=flops, transcendentals=b_pad, bytes_accessed=bytes_accessed),
    )(x, w1, b1, w2, b2, w3, b3)

    return out[:B]                                     # (B, 1)


def init_params(key, in_dim):
    """Deterministic init mimicking nn.Linear's U(-1/sqrt(fan_in), 1/sqrt(fan_in)).

    Stored in torch layout: weights (out, in) f32, biases (out,) f32.
    """
    dims = [(in_dim, 512), (512, 256), (256, 1)]
    params = {}
    keys = jax.random.split(key, 2 * len(dims))
    for i, (din, dout) in enumerate(dims):
        bound = 1.0 / (din ** 0.5)
        params[f"w{i+1}"] = jax.random.uniform(
            keys[2 * i], (dout, din), jnp.float32, minval=-bound, maxval=bound)
        params[f"b{i+1}"] = jax.random.uniform(
            keys[2 * i + 1], (dout,), jnp.float32, minval=-bound, maxval=bound)
    return params


def prepare_params(params):
    """One-time conversion of torch-layout params to the kernel layout/dtype.

    Call once at init (or after each optimizer step), NOT per forward call: the
    point is to keep weight casts/reshapes off the per-step path.
    """
    return {
        "w1": params["w1"].T.astype(jnp.bfloat16),                 # (D, 512)
        "b1": params["b1"].reshape(1, -1).astype(jnp.float32),     # (1, 512)
        "w2": params["w2"].T.astype(jnp.bfloat16),                 # (512, 256)
        "b2": params["b2"].reshape(1, -1).astype(jnp.float32),     # (1, 256)
        "w3": params["w3"].reshape(1, -1).astype(jnp.float32),     # (1, 256)
        "b3": params["b3"].reshape(1, 1).astype(jnp.float32),      # (1, 1)
    }


def _reference_forward(img, p):
    """Pure-JAX f32 reference matching the PyTorch module (torch layout)."""
    x = img.reshape(img.shape[0], -1)
    h = x @ p["w1"].T + p["b1"]
    h = jnp.where(h > 0, h, 0.2 * h)
    h = h @ p["w2"].T + p["b2"]
    h = jnp.where(h > 0, h, 0.2 * h)
    h = h @ p["w3"].T + p["b3"]
    return jax.nn.sigmoid(h)


if __name__ == "__main__":
    # Small shapes consistent with the module: channels=1, img_size=16
    B, C, H, W = 2, 1, 16, 16
    in_dim = C * H * W                     # == opt.img_size ** 2 when channels == 1

    key = jax.random.PRNGKey(0)
    k_img, k_params = jax.random.split(key)
    img = jax.random.normal(k_img, (B, C, H, W), dtype=jnp.float32)

    params = init_params(k_params, in_dim)         # torch-layout master params
    kparams = prepare_params(params)               # one-time kernel-layout copy

    out = discriminator_forward(img, kparams)
    out = jax.block_until_ready(out)

    ref = _reference_forward(img, params)

    assert out.shape == (B, 1), out.shape
    assert bool(jnp.all(jnp.isfinite(out)))
    # bf16 matmuls => loose tolerance vs the f32 reference (sigmoid is exact).
    assert bool(jnp.allclose(out, ref, atol=5e-2, rtol=5e-2)), (out, ref)
    print("KERNEL_OK")
</pallas_src>

<mosaic_0001>
module attributes {stable_mosaic.version = 11 : i64} {
  func.func @_discriminator_kernel(%arg0: i32, %arg1: memref<2x256xf32, #tpu.memory_space<vmem>>, %arg2: memref<256x512xbf16, #tpu.memory_space<vmem>>, %arg3: memref<1x512xf32, #tpu.memory_space<vmem>>, %arg4: memref<512x256xbf16, #tpu.memory_space<vmem>>, %arg5: memref<1x256xf32, #tpu.memory_space<vmem>>, %arg6: memref<1x256xf32, #tpu.memory_space<vmem>>, %arg7: memref<1x1xf32, #tpu.memory_space<vmem>>, %arg8: memref<2x1xf32, #tpu.memory_space<vmem>>) attributes {dimension_semantics = [#tpu.dimension_semantics<parallel>], iteration_bounds = array<i64: 1>, scalar_prefetch = 0 : i64, scratch_operands = 0 : i64, tpu.core_type = #tpu.core_type<tc>, window_params = [{transform_indices = @transform_0, window_bounds = array<i64: 2, 256>}, {pipeline_mode = #tpu.pipeline_mode<synchronous>, transform_indices = @transform_1, window_bounds = array<i64: 256, 512>}, {pipeline_mode = #tpu.pipeline_mode<synchronous>, transform_indices = @transform_2, window_bounds = array<i64: 1, 512>}, {pipeline_mode = #tpu.pipeline_mode<synchronous>, transform_indices = @transform_3, window_bounds = array<i64: 512, 256>}, {pipeline_mode = #tpu.pipeline_mode<synchronous>, transform_indices = @transform_4, window_bounds = array<i64: 1, 256>}, {pipeline_mode = #tpu.pipeline_mode<synchronous>, transform_indices = @transform_5, window_bounds = array<i64: 1, 256>}, {pipeline_mode = #tpu.pipeline_mode<synchronous>, transform_indices = @transform_6, window_bounds = array<i64: 1, 1>}, {transform_indices = @transform_7, window_bounds = array<i64: 2, 1>}]} {
    %c0 = arith.constant 0 : index
    %c0_0 = arith.constant 0 : index
    %0 = vector.load %arg1[%c0, %c0_0] : memref<2x256xf32, #tpu.memory_space<vmem>>, vector<2x256xf32>
    %1 = arith.truncf %0 : vector<2x256xf32> to vector<2x256xbf16>
    %c0_1 = arith.constant 0 : index
    %c0_2 = arith.constant 0 : index
    %2 = vector.load %arg2[%c0_1, %c0_2] : memref<256x512xbf16, #tpu.memory_space<vmem>>, vector<256x512xbf16>
    %cst = arith.constant dense<0.000000e+00> : vector<2x512xf32>
    %3 = tpu.matmul %1, %2, %cst {dimension_numbers = #tpu.dot_dimension_numbers<[1], [0], [0], [1], [0, 0, 1, 1], [], []>} : vector<2x256xbf16>, vector<256x512xbf16>, vector<2x512xf32> -> vector<2x512xf32>
    %c0_3 = arith.constant 0 : index
    %c0_4 = arith.constant 0 : index
    %4 = vector.load %arg3[%c0_3, %c0_4] : memref<1x512xf32, #tpu.memory_space<vmem>>, vector<1x512xf32>
    %5 = vector.broadcast %4 : vector<1x512xf32> to vector<2x512xf32>
    %6 = arith.addf %3, %5 : vector<2x512xf32>
    %cst_5 = arith.constant 2.000000e-01 : f32
    %7 = vector.broadcast %cst_5 : f32 to vector<2x512xf32>
    %8 = arith.mulf %7, %6 : vector<2x512xf32>
    %9 = arith.maximumf %6, %8 : vector<2x512xf32>
    %10 = arith.truncf %9 : vector<2x512xf32> to vector<2x512xbf16>
    %c0_6 = arith.constant 0 : index
    %c0_7 = arith.constant 0 : index
    %11 = vector.load %arg4[%c0_6, %c0_7] : memref<512x256xbf16, #tpu.memory_space<vmem>>, vector<512x256xbf16>
    %cst_8 = arith.constant dense<0.000000e+00> : vector<2x256xf32>
    %12 = tpu.matmul %10, %11, %cst_8 {dimension_numbers = #tpu.dot_dimension_numbers<[1], [0], [0], [1], [0, 0, 1, 1], [], []>} : vector<2x512xbf16>, vector<512x256xbf16>, vector<2x256xf32> -> vector<2x256xf32>
    %c0_9 = arith.constant 0 : index
    %c0_10 = arith.constant 0 : index
    %13 = vector.load %arg5[%c0_9, %c0_10] : memref<1x256xf32, #tpu.memory_space<vmem>>, vector<1x256xf32>
    %14 = vector.broadcast %13 : vector<1x256xf32> to vector<2x256xf32>
    %15 = arith.addf %12, %14 : vector<2x256xf32>
    %cst_11 = arith.constant 2.000000e-01 : f32
    %16 = vector.broadcast %cst_11 : f32 to vector<2x256xf32>
    %17 = arith.mulf %16, %15 : vector<2x256xf32>
    %18 = arith.maximumf %15, %17 : vector<2x256xf32>
    %c0_12 = arith.constant 0 : index
    %c0_13 = arith.constant 0 : index
    %19 = vector.load %arg6[%c0_12, %c0_13] : memref<1x256xf32, #tpu.memory_space<vmem>>, vector<1x256xf32>
    %20 = vector.broadcast %19 : vector<1x256xf32> to vector<2x256xf32>
    %21 = arith.mulf %18, %20 : vector<2x256xf32>
    %cst_14 = arith.constant dense<0.000000e+00> : vector<2xf32>
    %22 = vector.multi_reduction <add>, %21, %cst_14 [1] : vector<2x256xf32> to vector<2xf32>
    %23 = vector.shape_cast %22 : vector<2xf32> to vector<2x1xf32>
    %c0_15 = arith.constant 0 : index
    %c0_16 = arith.constant 0 : index
    %24 = vector.load %arg7[%c0_15, %c0_16] : memref<1x1xf32, #tpu.memory_space<vmem>>, vector<1x1xf32>
    %25 = vector.broadcast %24 : vector<1x1xf32> to vector<2x1xf32>
    %26 = arith.addf %23, %25 : vector<2x1xf32>
    %cst_17 = arith.constant 0.000000e+00 : f32
    %27 = vector.broadcast %cst_17 : f32 to vector<2x1xf32>
    %28 = arith.subf %27, %26 : vector<2x1xf32>
    %29 = math.exp %28 : vector<2x1xf32>
    %cst_18 = arith.constant 1.000000e+00 : f32
    %30 = vector.broadcast %cst_18 : f32 to vector<2x1xf32>
    %31 = arith.addf %30, %29 : vector<2x1xf32>
    %cst_19 = arith.constant 1.000000e+00 : f32
    %32 = vector.broadcast %cst_19 : f32 to vector<2x1xf32>
    %33 = arith.divf %32, %31 : vector<2x1xf32>
    %c0_20 = arith.constant 0 : index
    %c0_21 = arith.constant 0 : index
    %34 = vector.load %arg8[%c0_20, %c0_21] : memref<2x1xf32, #tpu.memory_space<vmem>>, vector<2x1xf32>
    tpu.vector_store %arg8[%c0_20, %c0_21], %33 {strides = array<i32>} : memref<2x1xf32, #tpu.memory_space<vmem>>, vector<2x1xf32>,
    return
  }
  func.func @transform_0(%arg0: i32) -> (i32, i32) {
    %c0_i32 = arith.constant 0 : i32
    %c0_i32_0 = arith.constant 0 : i32
    return %arg0, %c0_i32 : i32, i32
  }
  func.func @transform_1(%arg0: i32) -> (i32, i32) {
    %c0_i32 = arith.constant 0 : i32
    %c0_i32_0 = arith.constant 0 : i32
    %c0_i32_1 = arith.constant 0 : i32
    return %c0_i32, %c0_i32_0 : i32, i32
  }
  func.func @transform_2(%arg0: i32) -> (i32, i32) {
    %c0_i32 = arith.constant 0 : i32
    %c0_i32_0 = arith.constant 0 : i32
    %c0_i32_1 = arith.constant 0 : i32
    return %c0_i32, %c0_i32_0 : i32, i32
  }
  func.func @transform_3(%arg0: i32) -> (i32, i32) {
    %c0_i32 = arith.constant 0 : i32
    %c0_i32_0 = arith.constant 0 : i32
    %c0_i32_1 = arith.constant 0 : i32
    return %c0_i32, %c0_i32_0 : i32, i32
  }
  func.func @transform_4(%arg0: i32) -> (i32, i32) {
    %c0_i32 = arith.constant 0 : i32
    %c0_i32_0 = arith.constant 0 : i32
    %c0_i32_1 = arith.constant 0 : i32
    return %c0_i32, %c0_i32_0 : i32, i32
  }
  func.func @transform_5(%arg0: i32) -> (i32, i32) {
    %c0_i32 = arith.constant 0 : i32
    %c0_i32_0 = arith.constant 0 : i32
    %c0_i32_1 = arith.constant 0 : i32
    return %c0_i32, %c0_i32_0 : i32, i32
  }
  func.func @transform_6(%arg0: i32) -> (i32, i32) {
    %c0_i32 = arith.constant 0 : i32
    %c0_i32_0 = arith.constant 0 : i32
    %c0_i32_1 = arith.constant 0 : i32
    return %c0_i32, %c0_i32_0 : i32, i32
  }
  func.func @transform_7(%arg0: i32) -> (i32, i32) {
    %c0_i32 = arith.constant 0 : i32
    %c0_i32_0 = arith.constant 0 : i32
    return %arg0, %c0_i32 : i32, i32
  }
}

</mosaic_0001>

<llo_original>
// kernel: tpu_custom_call.1
$region0: #{tpu_custom_call.1}
  #allocation0 [shape = 'u32[]', space=smem, size = 0x4, offset = 0x4, fixed_abs, tag = 'smem constant byte address 0x4 - core index']
  #allocation1 [shape = 'u32[144,128]{1,0:T(1,128)}', space=vmem, size = 0x12000, scoped, tag = 'internal scratch']
  #allocation2 [shape = 'f32[1,1]{1,0:T(1,128)S(1)}', space=vmem, size = 0x200, scoped, tag = 'scoped memory for tpu_custom_call.1']
  %s0 = inlined_call_operand.hbm [shape: f32[2,256], index: 0, kind: input, shape index: {}]
  %s1 = inlined_call_operand.hbm [shape: bf16[256,512], index: 1, kind: input, shape index: {}]
  %s2 = inlined_call_operand.vmem [shape: f32[1,512], index: 2, kind: input, shape index: {}]
  %s3 = inlined_call_operand.hbm [shape: bf16[512,256], index: 3, kind: input, shape index: {}]
  %s4 = inlined_call_operand.vmem [shape: f32[1,256], index: 4, kind: input, shape index: {}]
  %s5 = inlined_call_operand.vmem [shape: f32[1,256], index: 5, kind: input, shape index: {}]
  %s6 = inlined_call_operand.<no memory space> [shape: f32[1,1], index: 6, kind: input, shape index: {}]
  %s7 = inlined_call_operand.vmem [shape: f32[2,1], index: 7, kind: output, shape index: {}]
  %s8 = sld [smem:[#allocation0]]
  $region50: #{tpu_custom_call.1} parent=0
    _
  %s10 = ssub.s32 1, %s8
  %s11 = scalar_select 0, %s10, %s8
  %v12 = vstv %s6
  %13 = vst [vmem:[#allocation2] sm:$0x1] %v12
  $region1: #{tpu_custom_call.1} parent=0
    #allocation3 [shape = 'u8[2048]{0}', space=vmem, size = 0x800, scoped, tag = 'input window, operand 0, single buffered']
    #allocation4 [shape = 's32[1]{0}', space=sflag, size = 0x4, scoped, tag = 'scoped memory for tpu_custom_call.1']
    #allocation5 [shape = 'u8[262144]{0}', space=vmem, size = 0x40000, scoped, tag = 'input window, operand 1, single buffered']
    #allocation6 [shape = 's32[1]{0}', space=sflag, size = 0x4, scoped, tag = 'scoped memory for tpu_custom_call.1']
    #allocation7 [shape = 'u8[262144]{0}', space=vmem, size = 0x40000, scoped, tag = 'input window, operand 3, single buffered']
    %14 = vsyncpa [#allocation4], 0
    %15 = vsyncpa [#allocation6], 0
    // Predicated region
    $region2: #{tpu_custom_call.1} parent=1 // pred_check
      _
    $region3: #{tpu_custom_call.1} parent=1 // pred_check_branch
      %17 = sbr.rel (0) target = $region5
    $region4: #{tpu_custom_call.1} parent=1 // pred_region
      %s19 = ssub.s32 64, 64
      %20 = vsyncadd [#allocation4], %s19
      %s22 = sshll.u32 [#allocation3], 4
      %s23 = int_to_ptr.vmem [resolvable:$true] %s22
      %25 = dma.hbm_to_vmem [thread:$0]  %s0, 64, %s23, [#allocation4]
    $region5: #{tpu_custom_call.1} parent=1 // pred_fallthru
      _
    // Predicated region
    $region6: #{tpu_custom_call.1} parent=1 // pred_check
      _
    $region7: #{tpu_custom_call.1} parent=1 // pred_check_branch
      %27 = sbr.rel (0) target = $region9
    $region8: #{tpu_custom_call.1} parent=1 // pred_region
      %s29 = ssub.s32 8192, 8192
      %30 = vsyncadd [#allocation6], %s29
      %s31 = sshll.u32 [#allocation5], 4
      %s32 = int_to_ptr.vmem [resolvable:$true] %s31
      %37 = dma.hbm_to_vmem [thread:$0]  %s1, 8192, %s32, [#allocation6], 256, 256, 16
    $region9: #{tpu_custom_call.1} parent=1 // pred_fallthru
      _
    // Predicated region
    $region10: #{tpu_custom_call.1} parent=1 // pred_check
      _
    $region11: #{tpu_custom_call.1} parent=1 // pred_check_branch
      %39 = sbr.rel (0) target = $region13
    $region12: #{tpu_custom_call.1} parent=1 // pred_region
      _
    $region13: #{tpu_custom_call.1} parent=1 // pred_fallthru
      _
    // Predicated region
    $region14: #{tpu_custom_call.1} parent=1 // pred_check
      _
    $region15: #{tpu_custom_call.1} parent=1 // pred_check_branch
      %41 = sbr.rel (0) target = $region17
    $region16: #{tpu_custom_call.1} parent=1 // pred_region
      %s43 = ssub.s32 8192, 8192
      %44 = vsyncadd [#allocation6], %s43
      %s45 = sshll.u32 [#allocation7], 4
      %s46 = int_to_ptr.vmem [resolvable:$true] %s45
      %51 = dma.hbm_to_vmem [thread:$0]  %s3, 8192, %s46, [#allocation6], 128, 128, 8
    $region17: #{tpu_custom_call.1} parent=1 // pred_fallthru
      _
    // Predicated region
    $region18: #{tpu_custom_call.1} parent=1 // pred_check
      _
    $region19: #{tpu_custom_call.1} parent=1 // pred_check_branch
      %53 = sbr.rel (0) target = $region21
    $region20: #{tpu_custom_call.1} parent=1 // pred_region
      _
    $region21: #{tpu_custom_call.1} parent=1 // pred_fallthru
      _
    // Predicated region
    $region22: #{tpu_custom_call.1} parent=1 // pred_check
      _
    $region23: #{tpu_custom_call.1} parent=1 // pred_check_branch
      %55 = sbr.rel (0) target = $region25
    $region24: #{tpu_custom_call.1} parent=1 // pred_region
      _
    $region25: #{tpu_custom_call.1} parent=1 // pred_fallthru
      _
    // Predicated region
    $region26: #{tpu_custom_call.1} parent=1 // pred_check
      _
    $region27: #{tpu_custom_call.1} parent=1 // pred_check_branch
      %57 = sbr.rel (0) target = $region29
    $region28: #{tpu_custom_call.1} parent=1 // pred_region
      _
    $region29: #{tpu_custom_call.1} parent=1 // pred_fallthru
      _
    // Predicated region
    $region30: #{tpu_custom_call.1} parent=1 // pred_check
      _
    $region31: #{tpu_custom_call.1} parent=1 // pred_check_branch
      %59 = sbr.rel (0) target = $region33
    $region32: #{tpu_custom_call.1} parent=1 // pred_region
      %60 = dma.done [#allocation4], 64
    $region33: #{tpu_custom_call.1} parent=1 // pred_fallthru
      _
    // Predicated region
    $region34: #{tpu_custom_call.1} parent=1 // pred_check
      _
    $region35: #{tpu_custom_call.1} parent=1 // pred_check_branch
      %62 = sbr.rel (0) target = $region37
    $region36: #{tpu_custom_call.1} parent=1 // pred_region
      %63 = dma.done [#allocation6], 8192
    $region37: #{tpu_custom_call.1} parent=1 // pred_fallthru
      _
    // Predicated region
    $region38: #{tpu_custom_call.1} parent=1 // pred_check
      _
    $region39: #{tpu_custom_call.1} parent=1 // pred_check_branch
      %65 = sbr.rel (0) target = $region41
    $region40: #{tpu_custom_call.1} parent=1 // pred_region
      %66 = dma.done [#allocation6], 8192
    $region41: #{tpu_custom_call.1} parent=1 // pred_fallthru
      _
    %v67 = vld [vmem:[#allocation3] sm:$0xf]
    %v70 = vunpack.c.l.s4 1983009808
    %v71 = vunpack.c.0.s8 %v70
    %v72 = vlaneseq
    %v73 = vshrl.u32 %v72, 7
    %v74 = vsub.s32 %v71, %v73
    %v75 = vrot.slane %v67, %v74
    %v76 = vcombine.high %v75, %v75
    %v79 = vpack.c.bf16 %v75, %v75
    %v80 = vpack.c.bf16 %v76, %v76
    %v81 = vld [vmem:[#allocation5] sm:$0xff]
    %v82 = vld [vmem:[#allocation5 + $0x8] sm:$0xff]
    %v83 = vld [vmem:[#allocation5 + $0x10] sm:$0xff]
    %v84 = vld [vmem:[#allocation5 + $0x18] sm:$0xff]
    %v85 = vld [vmem:[#allocation5 + $0x20] sm:$0xff]
    %v86 = vld [vmem:[#allocation5 + $0x28] sm:$0xff]
    %v87 = vld [vmem:[#allocation5 + $0x30] sm:$0xff]
    %v88 = vld [vmem:[#allocation5 + $0x38] sm:$0xff]
    %v89 = vld [vmem:[#allocation5 + $0x40] sm:$0xff]
    %v90 = vld [vmem:[#allocation5 + $0x48] sm:$0xff]
    %v91 = vld [vmem:[#allocation5 + $0x50] sm:$0xff]
    %v92 = vld [vmem:[#allocation5 + $0x58] sm:$0xff]
    %v93 = vld [vmem:[#allocation5 + $0x60] sm:$0xff]
    %v94 = vld [vmem:[#allocation5 + $0x68] sm:$0xff]
    %v95 = vld [vmem:[#allocation5 + $0x70] sm:$0xff]
    %v96 = vld [vmem:[#allocation5 + $0x78] sm:$0xff]
    %v97 = vld [vmem:[#allocation5 + $0x80] sm:$0xff]
    %v98 = vld [vmem:[#allocation5 + $0x88] sm:$0xff]
    %v99 = vld [vmem:[#allocation5 + $0x90] sm:$0xff]
    %v100 = vld [vmem:[#allocation5 + $0x98] sm:$0xff]
    %v101 = vld [vmem:[#allocation5 + $0xa0] sm:$0xff]
    %v102 = vld [vmem:[#allocation5 + $0xa8] sm:$0xff]
    %v103 = vld [vmem:[#allocation5 + $0xb0] sm:$0xff]
    %v104 = vld [vmem:[#allocation5 + $0xb8] sm:$0xff]
    %v105 = vld [vmem:[#allocation5 + $0xc0] sm:$0xff]
    %v106 = vld [vmem:[#allocation5 + $0xc8] sm:$0xff]
    %v107 = vld [vmem:[#allocation5 + $0xd0] sm:$0xff]
    %v108 = vld [vmem:[#allocation5 + $0xd8] sm:$0xff]
    %v109 = vld [vmem:[#allocation5 + $0xe0] sm:$0xff]
    %v110 = vld [vmem:[#allocation5 + $0xe8] sm:$0xff]
    %v111 = vld [vmem:[#allocation5 + $0xf0] sm:$0xff]
    %v112 = vld [vmem:[#allocation5 + $0xf8] sm:$0xff]
    %v113 = vld [vmem:[#allocation5 + $0x100] sm:$0xff]
    %v114 = vld [vmem:[#allocation5 + $0x108] sm:$0xff]
    %v115 = vld [vmem:[#allocation5 + $0x110] sm:$0xff]
    %v116 = vld [vmem:[#allocation5 + $0x118] sm:$0xff]
    %v117 = vld [vmem:[#allocation5 + $0x120] sm:$0xff]
    %v118 = vld [vmem:[#allocation5 + $0x128] sm:$0xff]
    %v119 = vld [vmem:[#allocation5 + $0x130] sm:$0xff]
    %v120 = vld [vmem:[#allocation5 + $0x138] sm:$0xff]
    %v121 = vld [vmem:[#allocation5 + $0x140] sm:$0xff]
    %v122 = vld [vmem:[#allocation5 + $0x148] sm:$0xff]
    %v123 = vld [vmem:[#allocation5 + $0x150] sm:$0xff]
    %v124 = vld [vmem:[#allocation5 + $0x158] sm:$0xff]
    %v125 = vld [vmem:[#allocation5 + $0x160] sm:$0xff]
    %v126 = vld [vmem:[#allocation5 + $0x168] sm:$0xff]
    %v127 = vld [vmem:[#allocation5 + $0x170] sm:$0xff]
    %v128 = vld [vmem:[#allocation5 + $0x178] sm:$0xff]
    %v129 = vld [vmem:[#allocation5 + $0x180] sm:$0xff]
    %v130 = vld [vmem:[#allocation5 + $0x188] sm:$0xff]
    %v131 = vld [vmem:[#allocation5 + $0x190] sm:$0xff]
    %v132 = vld [vmem:[#allocation5 + $0x198] sm:$0xff]
    %v133 = vld [vmem:[#allocation5 + $0x1a0] sm:$0xff]
    %v134 = vld [vmem:[#allocation5 + $0x1a8] sm:$0xff]
    %v135 = vld [vmem:[#allocation5 + $0x1b0] sm:$0xff]
    %v136 = vld [vmem:[#allocation5 + $0x1b8] sm:$0xff]
    %v137 = vld [vmem:[#allocation5 + $0x1c0] sm:$0xff]
    %v138 = vld [vmem:[#allocation5 + $0x1c8] sm:$0xff]
    %v139 = vld [vmem:[#allocation5 + $0x1d0] sm:$0xff]
    %v140 = vld [vmem:[#allocation5 + $0x1d8] sm:$0xff]
    %v141 = vld [vmem:[#allocation5 + $0x1e0] sm:$0xff]
    %v142 = vld [vmem:[#allocation5 + $0x1e8] sm:$0xff]
    %v143 = vld [vmem:[#allocation5 + $0x1f0] sm:$0xff]
    %v144 = vld [vmem:[#allocation5 + $0x1f8] sm:$0xff]
    %v145 = vld [vmem:[%s2] sm:$0xf]
    %v147 = vlaneseq
    %v148 = vshrl.u32 %v147, 7
    %v149 = vsub.s32 0, %v148
    %v150 = vrot.slane %v145, %v149
    %v151 = vlaneseq
    %v152 = vshrl.u32 %v151, 7
    %v153 = vsub.s32 1, %v152
    %v154 = vrot.slane %v145, %v153
    %v155 = vlaneseq
    %v156 = vshrl.u32 %v155, 7
    %v157 = vsub.s32 2, %v156
    %v158 = vrot.slane %v145, %v157
    %v159 = vlaneseq
    %v160 = vshrl.u32 %v159, 7
    %v161 = vsub.s32 3, %v160
    %v162 = vrot.slane %v145, %v161
    %v231 = vunpack.c.l.b16 %v81
    %v232 = vunpack.c.h.b16 %v81
    %v233 = vunpack.c.l.b16 %v82
    %v234 = vunpack.c.h.b16 %v82
    %v235 = vunpack.c.l.b16 %v83
    %v236 = vunpack.c.h.b16 %v83
    %v237 = vunpack.c.l.b16 %v84
    %v238 = vunpack.c.h.b16 %v84
    %v239 = vunpack.c.l.b16 %v85
    %v240 = vunpack.c.h.b16 %v85
    %v241 = vunpack.c.l.b16 %v86
    %v242 = vunpack.c.h.b16 %v86
    %v243 = vunpack.c.l.b16 %v87
    %v244 = vunpack.c.h.b16 %v87
    %v245 = vunpack.c.l.b16 %v88
    %v246 = vunpack.c.h.b16 %v88
    %v247 = vunpack.c.l.b16 %v89
    %v248 = vunpack.c.h.b16 %v89
    %v249 = vunpack.c.l.b16 %v90
    %v250 = vunpack.c.h.b16 %v90
    %v251 = vunpack.c.l.b16 %v91
    %v252 = vunpack.c.h.b16 %v91
    %v253 = vunpack.c.l.b16 %v92
    %v254 = vunpack.c.h.b16 %v92
    %v255 = vunpack.c.l.b16 %v93
    %v256 = vunpack.c.h.b16 %v93
    %v257 = vunpack.c.l.b16 %v94
    %v258 = vunpack.c.h.b16 %v94
    %v259 = vunpack.c.l.b16 %v95
    %v260 = vunpack.c.h.b16 %v95
    %v261 = vunpack.c.l.b16 %v96
    %v262 = vunpack.c.h.b16 %v96
    %v263 = vunpack.c.l.b16 %v97
    %v264 = vunpack.c.h.b16 %v97
    %v265 = vunpack.c.l.b16 %v98
    %v266 = vunpack.c.h.b16 %v98
    %v267 = vunpack.c.l.b16 %v99
    %v268 = vunpack.c.h.b16 %v99
    %v269 = vunpack.c.l.b16 %v100
    %v270 = vunpack.c.h.b16 %v100
    %v271 = vunpack.c.l.b16 %v101
    %v272 = vunpack.c.h.b16 %v101
    %v273 = vunpack.c.l.b16 %v102
    %v274 = vunpack.c.h.b16 %v102
    %v275 = vunpack.c.l.b16 %v103
    %v276 = vunpack.c.h.b16 %v103
    %v277 = vunpack.c.l.b16 %v104
    %v278 = vunpack.c.h.b16 %v104
    %v279 = vunpack.c.l.b16 %v105
    %v280 = vunpack.c.h.b16 %v105
    %v281 = vunpack.c.l.b16 %v106
    %v282 = vunpack.c.h.b16 %v106
    %v283 = vunpack.c.l.b16 %v107
    %v284 = vunpack.c.h.b16 %v107
    %v285 = vunpack.c.l.b16 %v108
    %v286 = vunpack.c.h.b16 %v108
    %v287 = vunpack.c.l.b16 %v109
    %v288 = vunpack.c.h.b16 %v109
    %v289 = vunpack.c.l.b16 %v110
    %v290 = vunpack.c.h.b16 %v110
    %v291 = vunpack.c.l.b16 %v111
    %v292 = vunpack.c.h.b16 %v111
    %v293 = vunpack.c.l.b16 %v112
    %v294 = vunpack.c.h.b16 %v112
    %v295 = vunpack.c.l.b16 %v113
    %v296 = vunpack.c.h.b16 %v113
    %v297 = vunpack.c.l.b16 %v114
    %v298 = vunpack.c.h.b16 %v114
    %v299 = vunpack.c.l.b16 %v115
    %v300 = vunpack.c.h.b16 %v115
    %v301 = vunpack.c.l.b16 %v116
    %v302 = vunpack.c.h.b16 %v116
    %v303 = vunpack.c.l.b16 %v117
    %v304 = vunpack.c.h.b16 %v117
    %v305 = vunpack.c.l.b16 %v118
    %v306 = vunpack.c.h.b16 %v118
    %v307 = vunpack.c.l.b16 %v119
    %v308 = vunpack.c.h.b16 %v119
    %v309 = vunpack.c.l.b16 %v120
    %v310 = vunpack.c.h.b16 %v120
    %v311 = vunpack.c.l.b16 %v121
    %v312 = vunpack.c.h.b16 %v121
    %v313 = vunpack.c.l.b16 %v122
    %v314 = vunpack.c.h.b16 %v122
    %v315 = vunpack.c.l.b16 %v123
    %v316 = vunpack.c.h.b16 %v123
    %v317 = vunpack.c.l.b16 %v124
    %v318 = vunpack.c.h.b16 %v124
    %v319 = vunpack.c.l.b16 %v125
    %v320 = vunpack.c.h.b16 %v125
    %v321 = vunpack.c.l.b16 %v126
    %v322 = vunpack.c.h.b16 %v126
    %v323 = vunpack.c.l.b16 %v127
    %v324 = vunpack.c.h.b16 %v127
    %v325 = vunpack.c.l.b16 %v128
    %v326 = vunpack.c.h.b16 %v128
    %v327 = vunpack.c.l.b16 %v129
    %v328 = vunpack.c.h.b16 %v129
    %v329 = vunpack.c.l.b16 %v130
    %v330 = vunpack.c.h.b16 %v130
    %v331 = vunpack.c.l.b16 %v131
    %v332 = vunpack.c.h.b16 %v131
    %v333 = vunpack.c.l.b16 %v132
    %v334 = vunpack.c.h.b16 %v132
    %v335 = vunpack.c.l.b16 %v133
    %v336 = vunpack.c.h.b16 %v133
    %v337 = vunpack.c.l.b16 %v134
    %v338 = vunpack.c.h.b16 %v134
    %v339 = vunpack.c.l.b16 %v135
    %v340 = vunpack.c.h.b16 %v135
    %v341 = vunpack.c.l.b16 %v136
    %v342 = vunpack.c.h.b16 %v136
    %v343 = vunpack.c.l.b16 %v137
    %v344 = vunpack.c.h.b16 %v137
    %v345 = vunpack.c.l.b16 %v138
    %v346 = vunpack.c.h.b16 %v138
    %v347 = vunpack.c.l.b16 %v139
    %v348 = vunpack.c.h.b16 %v139
    %v349 = vunpack.c.l.b16 %v140
    %v350 = vunpack.c.h.b16 %v140
    %v351 = vunpack.c.l.b16 %v141
    %v352 = vunpack.c.h.b16 %v141
    %v353 = vunpack.c.l.b16 %v142
    %v354 = vunpack.c.h.b16 %v142
    %v355 = vunpack.c.l.b16 %v143
    %v356 = vunpack.c.h.b16 %v143
    %v357 = vunpack.c.l.b16 %v144
    %v358 = vunpack.c.h.b16 %v144
    %v359 = vpack.c.b16 %v235, %v231
    %v360 = vpack.c.b16 %v236, %v232
    %v361 = vpack.c.b16 %v237, %v233
    %v362 = vpack.c.b16 %v238, %v234
    %v363 = vpack.c.b16 %v243, %v239
    %v364 = vpack.c.b16 %v244, %v240
    %v365 = vpack.c.b16 %v245, %v241
    %v366 = vpack.c.b16 %v246, %v242
    %v367 = vpack.c.b16 %v251, %v247
    %v368 = vpack.c.b16 %v252, %v248
    %v369 = vpack.c.b16 %v253, %v249
    %v370 = vpack.c.b16 %v254, %v250
    %v371 = vpack.c.b16 %v259, %v255
    %v372 = vpack.c.b16 %v260, %v256
    %v373 = vpack.c.b16 %v261, %v257
    %v374 = vpack.c.b16 %v262, %v258
    %v375 = vpack.c.b16 %v267, %v263
    %v376 = vpack.c.b16 %v268, %v264
    %v377 = vpack.c.b16 %v269, %v265
    %v378 = vpack.c.b16 %v270, %v266
    %v379 = vpack.c.b16 %v275, %v271
    %v380 = vpack.c.b16 %v276, %v272
    %v381 = vpack.c.b16 %v277, %v273
    %v382 = vpack.c.b16 %v278, %v274
    %v383 = vpack.c.b16 %v283, %v279
    %v384 = vpack.c.b16 %v284, %v280
    %v385 = vpack.c.b16 %v285, %v281
    %v386 = vpack.c.b16 %v286, %v282
    %v387 = vpack.c.b16 %v291, %v287
    %v388 = vpack.c.b16 %v292, %v288
    %v389 = vpack.c.b16 %v293, %v289
    %v390 = vpack.c.b16 %v294, %v290
    %v391 = vpack.c.b16 %v299, %v295
    %v392 = vpack.c.b16 %v300, %v296
    %v393 = vpack.c.b16 %v301, %v297
    %v394 = vpack.c.b16 %v302, %v298
    %v395 = vpack.c.b16 %v307, %v303
    %v396 = vpack.c.b16 %v308, %v304
    %v397 = vpack.c.b16 %v309, %v305
    %v398 = vpack.c.b16 %v310, %v306
    %v399 = vpack.c.b16 %v315, %v311
    %v400 = vpack.c.b16 %v316, %v312
    %v401 = vpack.c.b16 %v317, %v313
    %v402 = vpack.c.b16 %v318, %v314
    %v403 = vpack.c.b16 %v323, %v319
    %v404 = vpack.c.b16 %v324, %v320
    %v405 = vpack.c.b16 %v325, %v321
    %v406 = vpack.c.b16 %v326, %v322
    %v407 = vpack.c.b16 %v331, %v327
    %v408 = vpack.c.b16 %v332, %v328
    %v409 = vpack.c.b16 %v333, %v329
    %v410 = vpack.c.b16 %v334, %v330
    %v411 = vpack.c.b16 %v339, %v335
    %v412 = vpack.c.b16 %v340, %v336
    %v413 = vpack.c.b16 %v341, %v337
    %v414 = vpack.c.b16 %v342, %v338
    %v415 = vpack.c.b16 %v347, %v343
    %v416 = vpack.c.b16 %v348, %v344
    %v417 = vpack.c.b16 %v349, %v345
    %v418 = vpack.c.b16 %v350, %v346
    %v419 = vpack.c.b16 %v355, %v351
    %v420 = vpack.c.b16 %v356, %v352
    %v421 = vpack.c.b16 %v357, %v353
    %v422 = vpack.c.b16 %v358, %v354
    %487 = vmatprep.subr.bf16.mxu0 %v360
    %488 = vmatpush1.bf16.msra.mxu0 %v359
    %489 = vmatprep.subr.bf16.mxu0 %v364
    %490 = vmatpush1.bf16.msra.mxu0 %v363
    %491 = vmatprep.subr.bf16.mxu0 %v368
    %492 = vmatpush1.bf16.msra.mxu0 %v367
    %493 = vmatprep.subr.bf16.mxu0 %v372
    %494 = vmatpush1.bf16.msra.mxu0 %v371
    %495 = vmatprep.subr.bf16.mxu0 %v376
    %496 = vmatpush1.bf16.msra.mxu0 %v375
    %497 = vmatprep.subr.bf16.mxu0 %v380
    %498 = vmatpush1.bf16.msra.mxu0 %v379
    %499 = vmatprep.subr.bf16.mxu0 %v384
    %500 = vmatpush1.bf16.msra.mxu0 %v383
    %501 = vmatprep.subr.bf16.mxu0 %v388
    %502 = vmatpush1.bf16.msra.mxu0 %v387
    %503 = vmatprep.subr.bf16.mxu0 %v392
    %504 = vmatpush1.bf16.msra.mxu0 %v391
    %505 = vmatprep.subr.bf16.mxu0 %v396
    %506 = vmatpush1.bf16.msra.mxu0 %v395
    %507 = vmatprep.subr.bf16.mxu0 %v400
    %508 = vmatpush1.bf16.msra.mxu0 %v399
    %509 = vmatprep.subr.bf16.mxu0 %v404
    %510 = vmatpush1.bf16.msra.mxu0 %v403
    %511 = vmatprep.subr.bf16.mxu0 %v408
    %512 = vmatpush1.bf16.msra.mxu0 %v407
    %513 = vmatprep.subr.bf16.mxu0 %v412
    %514 = vmatpush1.bf16.msra.mxu0 %v411
    %515 = vmatprep.subr.bf16.mxu0 %v416
    %516 = vmatpush1.bf16.msra.mxu0 %v415
    %517 = vmatprep.subr.bf16.mxu0 %v420
    %518 = vmatpush1.bf16.msra.mxu0 %v419
    %519 = vmatprep.mubr.bf16.mxu0 %v80
    %520 = vmatmul.mubr.bf16.gmra.mrb[0].mxu0 %v79
    %v521 = vpop.f32.mrb[0].mxu0
    %v522 = vadd.f32 %v150, %v521
    %v523 = vpop.f32.mrb[0].mxu0
    %v524 = vadd.f32 %v154, %v523
    %v525 = vpop.f32.mrb[0].mxu0
    %v526 = vpop.f32.mrb[0].mxu0
    %527 = vdwg.mxu0
    %528 = vmatprep.subr.bf16.mxu0 %v362
    %529 = vmatpush1.bf16.msra.mxu0 %v361
    %530 = vmatprep.subr.bf16.mxu0 %v366
    %531 = vmatpush1.bf16.msra.mxu0 %v365
    %532 = vmatprep.subr.bf16.mxu0 %v370
    %533 = vmatpush1.bf16.msra.mxu0 %v369
    %534 = vmatprep.subr.bf16.mxu0 %v374
    %535 = vmatpush1.bf16.msra.mxu0 %v373
    %536 = vmatprep.subr.bf16.mxu0 %v378
    %537 = vmatpush1.bf16.msra.mxu0 %v377
    %538 = vmatprep.subr.bf16.mxu0 %v382
    %539 = vmatpush1.bf16.msra.mxu0 %v381
    %540 = vmatprep.subr.bf16.mxu0 %v386
    %541 = vmatpush1.bf16.msra.mxu0 %v385
    %542 = vmatprep.subr.bf16.mxu0 %v390
    %543 = vmatpush1.bf16.msra.mxu0 %v389
    %544 = vmatprep.subr.bf16.mxu0 %v394
    %545 = vmatpush1.bf16.msra.mxu0 %v393
    %546 = vmatprep.subr.bf16.mxu0 %v398
    %547 = vmatpush1.bf16.msra.mxu0 %v397
    %548 = vmatprep.subr.bf16.mxu0 %v402
    %549 = vmatpush1.bf16.msra.mxu0 %v401
    %550 = vmatprep.subr.bf16.mxu0 %v406
    %551 = vmatpush1.bf16.msra.mxu0 %v405
    %552 = vmatprep.subr.bf16.mxu0 %v410
    %553 = vmatpush1.bf16.msra.mxu0 %v409
    %554 = vmatprep.subr.bf16.mxu0 %v414
    %555 = vmatpush1.bf16.msra.mxu0 %v413
    %556 = vmatprep.subr.bf16.mxu0 %v418
    %557 = vmatpush1.bf16.msra.mxu0 %v417
    %558 = vmatprep.subr.bf16.mxu0 %v422
    %559 = vmatpush1.bf16.msra.mxu0 %v421
    %560 = vmatprep.mubr.bf16.mxu0 %v80
    %561 = vmatmul.mubr.bf16.gmra.mrb[0].mxu0 %v79
    %v562 = vpop.f32.mrb[0].mxu0
    %v563 = vadd.f32 %v158, %v562
    %v564 = vpop.f32.mrb[0].mxu0
    %v565 = vadd.f32 %v162, %v564
    %v566 = vpop.f32.mrb[0].mxu0
    %v567 = vpop.f32.mrb[0].mxu0
    %568 = vdwg.mxu0
    %v569 = vmul.f32 %v522, 0.2
    %v570 = vmul.f32 %v524, 0.2
    %v571 = vmul.f32 %v563, 0.2
    %v572 = vmul.f32 %v565, 0.2
    %v573 = vmax.f32 %v522, %v569
    %v574 = vmax.f32 %v524, %v570
    %v575 = vmax.f32 %v563, %v571
    %v576 = vmax.f32 %v565, %v572
    %v577 = vpack.c.bf16 %v573, %v573
    %v578 = vpack.c.bf16 %v574, %v574
    %v579 = vpack.c.bf16 %v575, %v575
    %v580 = vpack.c.bf16 %v576, %v576
    %v581 = vld [vmem:[#allocation7] sm:$0xff]
    %v582 = vld [vmem:[#allocation7 + $0x8] sm:$0xff]
    %v583 = vld [vmem:[#allocation7 + $0x10] sm:$0xff]
    %v584 = vld [vmem:[#allocation7 + $0x18] sm:$0xff]
    %v585 = vld [vmem:[#allocation7 + $0x20] sm:$0xff]
    %v586 = vld [vmem:[#allocation7 + $0x28] sm:$0xff]
    %v587 = vld [vmem:[#allocation7 + $0x30] sm:$0xff]
    %v588 = vld [vmem:[#allocation7 + $0x38] sm:$0xff]
    %v589 = vld [vmem:[#allocation7 + $0x40] sm:$0xff]
    %v590 = vld [vmem:[#allocation7 + $0x48] sm:$0xff]
    %v591 = vld [vmem:[#allocation7 + $0x50] sm:$0xff]
    %v592 = vld [vmem:[#allocation7 + $0x58] sm:$0xff]
    %v593 = vld [vmem:[#allocation7 + $0x60] sm:$0xff]
    %v594 = vld [vmem:[#allocation7 + $0x68] sm:$0xff]
    %v595 = vld [vmem:[#allocation7 + $0x70] sm:$0xff]
    %v596 = vld [vmem:[#allocation7 + $0x78] sm:$0xff]
    %v597 = vld [vmem:[#allocation7 + $0x80] sm:$0xff]
    %v598 = vld [vmem:[#allocation7 + $0x88] sm:$0xff]
    %v599 = vld [vmem:[#allocation7 + $0x90] sm:$0xff]
    %v600 = vld [vmem:[#allocation7 + $0x98] sm:$0xff]
    %v601 = vld [vmem:[#allocation7 + $0xa0] sm:$0xff]
    %v602 = vld [vmem:[#allocation7 + $0xa8] sm:$0xff]
    %v603 = vld [vmem:[#allocation7 + $0xb0] sm:$0xff]
    %v604 = vld [vmem:[#allocation7 + $0xb8] sm:$0xff]
    %v605 = vld [vmem:[#allocation7 + $0xc0] sm:$0xff]
    %v606 = vld [vmem:[#allocation7 + $0xc8] sm:$0xff]
    %v607 = vld [vmem:[#allocation7 + $0xd0] sm:$0xff]
    %v608 = vld [vmem:[#allocation7 + $0xd8] sm:$0xff]
    %v609 = vld [vmem:[#allocation7 + $0xe0] sm:$0xff]
    %v610 = vld [vmem:[#allocation7 + $0xe8] sm:$0xff]
    %v611 = vld [vmem:[#allocation7 + $0xf0] sm:$0xff]
    %v612 = vld [vmem:[#allocation7 + $0xf8] sm:$0xff]
    %v613 = vld [vmem:[#allocation7 + $0x100] sm:$0xff]
    %v614 = vld [vmem:[#allocation7 + $0x108] sm:$0xff]
    %v615 = vld [vmem:[#allocation7 + $0x110] sm:$0xff]
    %v616 = vld [vmem:[#allocation7 + $0x118] sm:$0xff]
    %v617 = vld [vmem:[#allocation7 + $0x120] sm:$0xff]
    %v618 = vld [vmem:[#allocation7 + $0x128] sm:$0xff]
    %v619 = vld [vmem:[#allocation7 + $0x130] sm:$0xff]
    %v620 = vld [vmem:[#allocation7 + $0x138] sm:$0xff]
    %v621 = vld [vmem:[#allocation7 + $0x140] sm:$0xff]
    %v622 = vld [vmem:[#allocation7 + $0x148] sm:$0xff]
    %v623 = vld [vmem:[#allocation7 + $0x150] sm:$0xff]
    %v624 = vld [vmem:[#allocation7 + $0x158] sm:$0xff]
    %v625 = vld [vmem:[#allocation7 + $0x160] sm:$0xff]
    %v626 = vld [vmem:[#allocation7 + $0x168] sm:$0xff]
    %v627 = vld [vmem:[#allocation7 + $0x170] sm:$0xff]
    %v628 = vld [vmem:[#allocation7 + $0x178] sm:$0xff]
    %v629 = vld [vmem:[#allocation7 + $0x180] sm:$0xff]
    %v630 = vld [vmem:[#allocation7 + $0x188] sm:$0xff]
    %v631 = vld [vmem:[#allocation7 + $0x190] sm:$0xff]
    %v632 = vld [vmem:[#allocation7 + $0x198] sm:$0xff]
    %v633 = vld [vmem:[#allocation7 + $0x1a0] sm:$0xff]
    %v634 = vld [vmem:[#allocation7 + $0x1a8] sm:$0xff]
    %v635 = vld [vmem:[#allocation7 + $0x1b0] sm:$0xff]
    %v636 = vld [vmem:[#allocation7 + $0x1b8] sm:$0xff]
    %v637 = vld [vmem:[#allocation7 + $0x1c0] sm:$0xff]
    %v638 = vld [vmem:[#allocation7 + $0x1c8] sm:$0xff]
    %v639 = vld [vmem:[#allocation7 + $0x1d0] sm:$0xff]
    %v640 = vld [vmem:[#allocation7 + $0x1d8] sm:$0xff]
    %v641 = vld [vmem:[#allocation7 + $0x1e0] sm:$0xff]
    %v642 = vld [vmem:[#allocation7 + $0x1e8] sm:$0xff]
    %v643 = vld [vmem:[#allocation7 + $0x1f0] sm:$0xff]
    %v644 = vld [vmem:[#allocation7 + $0x1f8] sm:$0xff]
    %v645 = vld [vmem:[%s4] sm:$0x3]
    %v647 = vlaneseq
    %v648 = vshrl.u32 %v647, 7
    %v649 = vsub.s32 0, %v648
    %v650 = vrot.slane %v645, %v649
    %v651 = vlaneseq
    %v652 = vshrl.u32 %v651, 7
    %v653 = vsub.s32 1, %v652
    %v654 = vrot.slane %v645, %v653
    %v721 = vunpack.c.l.b16 %v581
    %v722 = vunpack.c.h.b16 %v581
    %v723 = vunpack.c.l.b16 %v582
    %v724 = vunpack.c.h.b16 %v582
    %v725 = vunpack.c.l.b16 %v583
    %v726 = vunpack.c.h.b16 %v583
    %v727 = vunpack.c.l.b16 %v584
    %v728 = vunpack.c.h.b16 %v584
    %v729 = vunpack.c.l.b16 %v585
    %v730 = vunpack.c.h.b16 %v585
    %v731 = vunpack.c.l.b16 %v586
    %v732 = vunpack.c.h.b16 %v586
    %v733 = vunpack.c.l.b16 %v587
    %v734 = vunpack.c.h.b16 %v587
    %v735 = vunpack.c.l.b16 %v588
    %v736 = vunpack.c.h.b16 %v588
    %v737 = vunpack.c.l.b16 %v589
    %v738 = vunpack.c.h.b16 %v589
    %v739 = vunpack.c.l.b16 %v590
    %v740 = vunpack.c.h.b16 %v590
    %v741 = vunpack.c.l.b16 %v591
    %v742 = vunpack.c.h.b16 %v591
    %v743 = vunpack.c.l.b16 %v592
    %v744 = vunpack.c.h.b16 %v592
    %v745 = vunpack.c.l.b16 %v593
    %v746 = vunpack.c.h.b16 %v593
    %v747 = vunpack.c.l.b16 %v594
    %v748 = vunpack.c.h.b16 %v594
    %v749 = vunpack.c.l.b16 %v595
    %v750 = vunpack.c.h.b16 %v595
    %v751 = vunpack.c.l.b16 %v596
    %v752 = vunpack.c.h.b16 %v596
    %v753 = vunpack.c.l.b16 %v597
    %v754 = vunpack.c.h.b16 %v597
    %v755 = vunpack.c.l.b16 %v598
    %v756 = vunpack.c.h.b16 %v598
    %v757 = vunpack.c.l.b16 %v599
    %v758 = vunpack.c.h.b16 %v599
    %v759 = vunpack.c.l.b16 %v600
    %v760 = vunpack.c.h.b16 %v600
    %v761 = vunpack.c.l.b16 %v601
    %v762 = vunpack.c.h.b16 %v601
    %v763 = vunpack.c.l.b16 %v602
    %v764 = vunpack.c.h.b16 %v602
    %v765 = vunpack.c.l.b16 %v603
    %v766 = vunpack.c.h.b16 %v603
    %v767 = vunpack.c.l.b16 %v604
    %v768 = vunpack.c.h.b16 %v604
    %v769 = vunpack.c.l.b16 %v605
    %v770 = vunpack.c.h.b16 %v605
    %v771 = vunpack.c.l.b16 %v606
    %v772 = vunpack.c.h.b16 %v606
    %v773 = vunpack.c.l.b16 %v607
    %v774 = vunpack.c.h.b16 %v607
    %v775 = vunpack.c.l.b16 %v608
    %v776 = vunpack.c.h.b16 %v608
    %v777 = vunpack.c.l.b16 %v609
    %v778 = vunpack.c.h.b16 %v609
    %v779 = vunpack.c.l.b16 %v610
    %v780 = vunpack.c.h.b16 %v610
    %v781 = vunpack.c.l.b16 %v611
    %v782 = vunpack.c.h.b16 %v611
    %v783 = vunpack.c.l.b16 %v612
    %v784 = vunpack.c.h.b16 %v612
    %v785 = vunpack.c.l.b16 %v613
    %v786 = vunpack.c.h.b16 %v613
    %v787 = vunpack.c.l.b16 %v614
    %v788 = vunpack.c.h.b16 %v614
    %v789 = vunpack.c.l.b16 %v615
    %v790 = vunpack.c.h.b16 %v615
    %v791 = vunpack.c.l.b16 %v616
    %v792 = vunpack.c.h.b16 %v616
    %v793 = vunpack.c.l.b16 %v617
    %v794 = vunpack.c.h.b16 %v617
    %v795 = vunpack.c.l.b16 %v618
    %v796 = vunpack.c.h.b16 %v618
    %v797 = vunpack.c.l.b16 %v619
    %v798 = vunpack.c.h.b16 %v619
    %v799 = vunpack.c.l.b16 %v620
    %v800 = vunpack.c.h.b16 %v620
    %v801 = vunpack.c.l.b16 %v621
    %v802 = vunpack.c.h.b16 %v621
    %v803 = vunpack.c.l.b16 %v622
    %v804 = vunpack.c.h.b16 %v622
    %v805 = vunpack.c.l.b16 %v623
    %v806 = vunpack.c.h.b16 %v623
    %v807 = vunpack.c.l.b16 %v624
    %v808 = vunpack.c.h.b16 %v624
    %v809 = vunpack.c.l.b16 %v625
    %v810 = vunpack.c.h.b16 %v625
    %v811 = vunpack.c.l.b16 %v626
    %v812 = vunpack.c.h.b16 %v626
    %v813 = vunpack.c.l.b16 %v627
    %v814 = vunpack.c.h.b16 %v627
    %v815 = vunpack.c.l.b16 %v628
    %v816 = vunpack.c.h.b16 %v628
    %v817 = vunpack.c.l.b16 %v629
    %v818 = vunpack.c.h.b16 %v629
    %v819 = vunpack.c.l.b16 %v630
    %v820 = vunpack.c.h.b16 %v630
    %v821 = vunpack.c.l.b16 %v631
    %v822 = vunpack.c.h.b16 %v631
    %v823 = vunpack.c.l.b16 %v632
    %v824 = vunpack.c.h.b16 %v632
    %v825 = vunpack.c.l.b16 %v633
    %v826 = vunpack.c.h.b16 %v633
    %v827 = vunpack.c.l.b16 %v634
    %v828 = vunpack.c.h.b16 %v634
    %v829 = vunpack.c.l.b16 %v635
    %v830 = vunpack.c.h.b16 %v635
    %v831 = vunpack.c.l.b16 %v636
    %v832 = vunpack.c.h.b16 %v636
    %v833 = vunpack.c.l.b16 %v637
    %v834 = vunpack.c.h.b16 %v637
    %v835 = vunpack.c.l.b16 %v638
    %v836 = vunpack.c.h.b16 %v638
    %v837 = vunpack.c.l.b16 %v639
    %v838 = vunpack.c.h.b16 %v639
    %v839 = vunpack.c.l.b16 %v640
    %v840 = vunpack.c.h.b16 %v640
    %v841 = vunpack.c.l.b16 %v641
    %v842 = vunpack.c.h.b16 %v641
    %v843 = vunpack.c.l.b16 %v642
    %v844 = vunpack.c.h.b16 %v642
    %v845 = vunpack.c.l.b16 %v643
    %v846 = vunpack.c.h.b16 %v643
    %v847 = vunpack.c.l.b16 %v644
    %v848 = vunpack.c.h.b16 %v644
    %v849 = vpack.c.b16 %v723, %v721
    %v850 = vpack.c.b16 %v724, %v722
    %v851 = vpack.c.b16 %v727, %v725
    %v852 = vpack.c.b16 %v728, %v726
    %v853 = vpack.c.b16 %v731, %v729
    %v854 = vpack.c.b16 %v732, %v730
    %v855 = vpack.c.b16 %v735, %v733
    %v856 = vpack.c.b16 %v736, %v734
    %v857 = vpack.c.b16 %v739, %v737
    %v858 = vpack.c.b16 %v740, %v738
    %v859 = vpack.c.b16 %v743, %v741
    %v860 = vpack.c.b16 %v744, %v742
    %v861 = vpack.c.b16 %v747, %v745
    %v862 = vpack.c.b16 %v748, %v746
    %v863 = vpack.c.b16 %v751, %v749
    %v864 = vpack.c.b16 %v752, %v750
    %v865 = vpack.c.b16 %v755, %v753
    %v866 = vpack.c.b16 %v756, %v754
    %v867 = vpack.c.b16 %v759, %v757
    %v868 = vpack.c.b16 %v760, %v758
    %v869 = vpack.c.b16 %v763, %v761
    %v870 = vpack.c.b16 %v764, %v762
    %v871 = vpack.c.b16 %v767, %v765
    %v872 = vpack.c.b16 %v768, %v766
    %v873 = vpack.c.b16 %v771, %v769
    %v874 = vpack.c.b16 %v772, %v770
    %v875 = vpack.c.b16 %v775, %v773
    %v876 = vpack.c.b16 %v776, %v774
    %v877 = vpack.c.b16 %v779, %v777
    %v878 = vpack.c.b16 %v780, %v778
    %v879 = vpack.c.b16 %v783, %v781
    %v880 = vpack.c.b16 %v784, %v782
    %v881 = vpack.c.b16 %v787, %v785
    %v882 = vpack.c.b16 %v788, %v786
    %v883 = vpack.c.b16 %v791, %v789
    %v884 = vpack.c.b16 %v792, %v790
    %v885 = vpack.c.b16 %v795, %v793
    %v886 = vpack.c.b16 %v796, %v794
    %v887 = vpack.c.b16 %v799, %v797
    %v888 = vpack.c.b16 %v800, %v798
    %v889 = vpack.c.b16 %v803, %v801
    %v890 = vpack.c.b16 %v804, %v802
    %v891 = vpack.c.b16 %v807, %v805
    %v892 = vpack.c.b16 %v808, %v806
    %v893 = vpack.c.b16 %v811, %v809
    %v894 = vpack.c.b16 %v812, %v810
    %v895 = vpack.c.b16 %v815, %v813
    %v896 = vpack.c.b16 %v816, %v814
    %v897 = vpack.c.b16 %v819, %v817
    %v898 = vpack.c.b16 %v820, %v818
    %v899 = vpack.c.b16 %v823, %v821
    %v900 = vpack.c.b16 %v824, %v822
    %v901 = vpack.c.b16 %v827, %v825
    %v902 = vpack.c.b16 %v828, %v826
    %v903 = vpack.c.b16 %v831, %v829
    %v904 = vpack.c.b16 %v832, %v830
    %v905 = vpack.c.b16 %v835, %v833
    %v906 = vpack.c.b16 %v836, %v834
    %v907 = vpack.c.b16 %v839, %v837
    %v908 = vpack.c.b16 %v840, %v838
    %v909 = vpack.c.b16 %v843, %v841
    %v910 = vpack.c.b16 %v844, %v842
    %v911 = vpack.c.b16 %v847, %v845
    %v912 = vpack.c.b16 %v848, %v846
    %977 = vmatprep.subr.bf16.mxu0 %v850
    %978 = vmatpush1.bf16.msra.mxu0 %v849
    %979 = vmatprep.subr.bf16.mxu0 %v852
    %980 = vmatpush1.bf16.msra.mxu0 %v851
    %981 = vmatprep.subr.bf16.mxu0 %v854
    %982 = vmatpush1.bf16.msra.mxu0 %v853
    %983 = vmatprep.subr.bf16.mxu0 %v856
    %984 = vmatpush1.bf16.msra.mxu0 %v855
    %985 = vmatprep.subr.bf16.mxu0 %v858
    %986 = vmatpush1.bf16.msra.mxu0 %v857
    %987 = vmatprep.subr.bf16.mxu0 %v860
    %988 = vmatpush1.bf16.msra.mxu0 %v859
    %989 = vmatprep.subr.bf16.mxu0 %v862
    %990 = vmatpush1.bf16.msra.mxu0 %v861
    %991 = vmatprep.subr.bf16.mxu0 %v864
    %992 = vmatpush1.bf16.msra.mxu0 %v863
    %993 = vmatprep.subr.bf16.mxu0 %v866
    %994 = vmatpush1.bf16.msra.mxu0 %v865
    %995 = vmatprep.subr.bf16.mxu0 %v868
    %996 = vmatpush1.bf16.msra.mxu0 %v867
    %997 = vmatprep.subr.bf16.mxu0 %v870
    %998 = vmatpush1.bf16.msra.mxu0 %v869
    %999 = vmatprep.subr.bf16.mxu0 %v872
    %1000 = vmatpush1.bf16.msra.mxu0 %v871
    %1001 = vmatprep.subr.bf16.mxu0 %v874
    %1002 = vmatpush1.bf16.msra.mxu0 %v873
    %1003 = vmatprep.subr.bf16.mxu0 %v876
    %1004 = vmatpush1.bf16.msra.mxu0 %v875
    %1005 = vmatprep.subr.bf16.mxu0 %v878
    %1006 = vmatpush1.bf16.msra.mxu0 %v877
    %1007 = vmatprep.subr.bf16.mxu0 %v880
    %1008 = vmatpush1.bf16.msra.mxu0 %v879
    %1009 = vmatprep.mubr.bf16.mxu0 %v578
    %1010 = vmatmul.mubr.bf16.gmra.mrb[0].mxu0 %v577
    %v1011 = vpop.f32.mrb[0].mxu0
    %v1012 = vadd.f32 %v650, %v1011
    %v1013 = vpop.f32.mrb[0].mxu0
    %v1014 = vadd.f32 %v654, %v1013
    %v1015 = vpop.f32.mrb[0].mxu0
    %v1016 = vpop.f32.mrb[0].mxu0
    %1017 = vdwg.mxu0
    %1018 = vmatprep.subr.bf16.mxu0 %v882
    %1019 = vmatpush1.bf16.msra.mxu0 %v881
    %1020 = vmatprep.subr.bf16.mxu0 %v884
    %1021 = vmatpush1.bf16.msra.mxu0 %v883
    %1022 = vmatprep.subr.bf16.mxu0 %v886
    %1023 = vmatpush1.bf16.msra.mxu0 %v885
    %1024 = vmatprep.subr.bf16.mxu0 %v888
    %1025 = vmatpush1.bf16.msra.mxu0 %v887
    %1026 = vmatprep.subr.bf16.mxu0 %v890
    %1027 = vmatpush1.bf16.msra.mxu0 %v889
    %1028 = vmatprep.subr.bf16.mxu0 %v892
    %1029 = vmatpush1.bf16.msra.mxu0 %v891
    %1030 = vmatprep.subr.bf16.mxu0 %v894
    %1031 = vmatpush1.bf16.msra.mxu0 %v893
    %1032 = vmatprep.subr.bf16.mxu0 %v896
    %1033 = vmatpush1.bf16.msra.mxu0 %v895
    %1034 = vmatprep.subr.bf16.mxu0 %v898
    %1035 = vmatpush1.bf16.msra.mxu0 %v897
    %1036 = vmatprep.subr.bf16.mxu0 %v900
    %1037 = vmatpush1.bf16.msra.mxu0 %v899
    %1038 = vmatprep.subr.bf16.mxu0 %v902
    %1039 = vmatpush1.bf16.msra.mxu0 %v901
    %1040 = vmatprep.subr.bf16.mxu0 %v904
    %1041 = vmatpush1.bf16.msra.mxu0 %v903
    %1042 = vmatprep.subr.bf16.mxu0 %v906
    %1043 = vmatpush1.bf16.msra.mxu0 %v905
    %1044 = vmatprep.subr.bf16.mxu0 %v908
    %1045 = vmatpush1.bf16.msra.mxu0 %v907
    %1046 = vmatprep.subr.bf16.mxu0 %v910
    %1047 = vmatpush1.bf16.msra.mxu0 %v909
    %1048 = vmatprep.subr.bf16.mxu0 %v912
    %1049 = vmatpush1.bf16.msra.mxu0 %v911
    %1050 = vmatprep.mubr.bf16.mxu0 %v580
    %1051 = vmatmul.mubr.bf16.gmra.mrb[0].mxu0 %v579
    %v1052 = vpop.f32.mrb[0].mxu0
    %v1053 = vadd.f32 %v1012, %v1052
    %v1054 = vpop.f32.mrb[0].mxu0
    %v1055 = vadd.f32 %v1014, %v1054
    %v1056 = vpop.f32.mrb[0].mxu0
    %v1057 = vpop.f32.mrb[0].mxu0
    %1058 = vdwg.mxu0
    %v1059 = vmul.f32 %v1053, 0.2
    %v1060 = vmul.f32 %v1055, 0.2
    %v1061 = vmax.f32 %v1053, %v1059
    %v1062 = vmax.f32 %v1055, %v1060
    %v1063 = vld [vmem:[%s5] sm:$0x3]
    %v1065 = vlaneseq
    %v1066 = vshrl.u32 %v1065, 7
    %v1067 = vsub.s32 0, %v1066
    %v1068 = vrot.slane %v1063, %v1067
    %v1069 = vlaneseq
    %v1070 = vshrl.u32 %v1069, 7
    %v1071 = vsub.s32 1, %v1070
    %v1072 = vrot.slane %v1063, %v1071
    %v1075 = vmul.f32 %v1061, %v1068
    %v1076 = vmul.f32 %v1062, %v1072
    %vm1077 = vcmask 1041408
    %v1078 = vsel %vm1077, %v1075, 0.0
    %v1079 = vsel %vm1077, %v1076, 0.0
    %v1080 = vadd.f32 %v1078, %v1079
    %1081 = vadd.xlane.f32.xlu0 %v1080
    %v1082 = vpop.xlane.xlu0 %1081
    %v1083 = vld [vmem:[#allocation2] sm:$0x1]
    %v1085 = vlaneseq
    %v1086 = vshrl.u32 %v1085, 7
    %v1087 = vsub.s32 0, %v1086
    %v1088 = vrot.slane %v1083, %v1087
    %v1090 = vadd.f32 %v1082, %v1088
    %v1091 = vsub.f32 0.0, %v1090
    %v1092 = vmul.f32 %v1091, 1.442695
    %v1093 = vpow.pop %v1092
    %v1094 = vadd.f32 %v1093, 1.0
    %v1095 = vrcp.pop %v1094
    %v1096 = vmul.f32 1.0, %v1095
    %vm1097 = vcmask 1024
    %1098 = vst.msk [vmem:[%s7] sm:$0x3] %vm1097, %v1096
    // Predicated region
    $region42: #{tpu_custom_call.1} parent=1 // pred_check
      _
    $region43: #{tpu_custom_call.1} parent=1 // pred_check_branch
      %1100 = sbr.rel (0) target = $region45
    $region44: #{tpu_custom_call.1} parent=1 // pred_region
      _
    $region45: #{tpu_custom_call.1} parent=1 // pred_fallthru
      _
    // Predicated region
    $region46: #{tpu_custom_call.1} parent=1 // pred_check
      _
    $region47: #{tpu_custom_call.1} parent=1 // pred_check_branch
      %1102 = sbr.rel (0) target = $region49
    $region48: #{tpu_custom_call.1} parent=1 // pred_region
      _
    $region49: #{tpu_custom_call.1} parent=1 // pred_fallthru
      _
    %1103 = vsyncpa [#allocation4], 1
    %1104 = vsyncpa [#allocation6], 1

</llo_original>
